<compile_context>
chip_gen: v6e
topology: v6e:2x2x1
jax: 0.10.0
libtpu: 0.0.40
codegen_flags: <defaults>
</compile_context>

<pallas_src>
import functools

import jax
import jax.numpy as jnp
from jax.experimental import pallas as pl
from jax.experimental.pallas import tpu as pltpu


def _binary_linear_kernel(scale_ref, x_ref, w_ref, *rest, has_bias, use_acc):
    """One (tm, tn, tk) grid step: accumulate x @ Wb (Wb pre-binarized, (K,N))."""
    if has_bias and use_acc:
        b_ref, o_ref, acc_ref = rest
    elif has_bias:
        b_ref, o_ref = rest
        acc_ref = o_ref                      # f32 output block doubles as accumulator
    elif use_acc:
        o_ref, acc_ref = rest
    else:
        (o_ref,) = rest
        acc_ref = o_ref

    k = pl.program_id(2)

    @pl.when(k == 0)
    def _():
        acc_ref[...] = jnp.zeros_like(acc_ref)

    x = x_ref[...]                           # (tm, tk)
    w = w_ref[...]                           # (tk, tn)  pre-binarized, pre-transposed
    if not (x.dtype == jnp.bfloat16 and w.dtype == jnp.bfloat16):
        # Mixed / f32 path: upcast (cheap VPU) and run the exact f32 matmul.
        x = x.astype(jnp.float32)
        w = w.astype(jnp.float32)

    acc_ref[...] += jax.lax.dot_general(
        x, w, (((1,), (0,)), ((), ())),
        preferred_element_type=jnp.float32).astype(acc_ref.dtype)

    @pl.when(k == pl.num_programs(2) - 1)
    def _():
        out = acc_ref[...].astype(jnp.float32) * scale_ref[0, 0]
        if has_bias:
            out = out + b_ref[...].astype(jnp.float32)   # (1, tn) broadcasts
        o_ref[...] = out.astype(o_ref.dtype)


def _round_up(v, m):
    return (v + m - 1) // m * m


def _pick_tile(dim, want):
    """Return (tile, padded_dim). Full-dim block when dim <= want (the (8,128)
    divisibility rule is waived for full-dim blocks -> no padding); otherwise
    tile = want and the dim is zero-padded up to a multiple of it."""
    if dim <= want:
        return dim, dim
    return want, _round_up(dim, want)


def prepare_binary_weight(weight, bin_mode):
    """Wrapper-side weight prep (hoist out of the per-call path for static weights).

    Returns (wb_t, scale): wb_t is the pre-binarized, pre-transposed (K, N) weight
    (bf16 where lossless), scale is the (1,1) f32 global scale (0.3 folded in for
    'binary')."""
    w32 = weight.astype(jnp.float32)
    scale = jnp.mean(jnp.abs(w32))
    if bin_mode == "binary":
        scale = scale * jnp.float32(0.3)
        wb = (w32 > 0.0).astype(jnp.bfloat16)          # {0,1}: exact in bf16
    elif bin_mode == "sign":
        wb = jnp.sign(w32).astype(jnp.bfloat16)        # {-1,0,1}: exact in bf16
    elif bin_mode == "relu":
        wb = jnp.clip(w32, 0.0, 1.0)                   # keep f32 (not bf16-exact)
    else:
        # TODO(synk): stochastic binarization branch (uses torch.rand) not implemented.
        raise NotImplementedError("stochastic bin_mode not supported")
    return wb.T, scale.reshape(1, 1).astype(jnp.float32)


def binary_linear(x, weight, bias=None, bin_mode="binary",
                  tm=256, tn=512, tk=512, mxu_bf16=False, prepared=None):
    """Pallas forward of BinaryLinear: x (B,K), weight (N,K) -> (B,N)."""
    B, K = x.shape
    N, K2 = weight.shape
    assert K == K2, "in_features mismatch"
    has_bias = bias is not None
    out_dtype = x.dtype

    # ---- weight prep (binarize + scale + transpose), hoistable across calls ----
    if prepared is None:
        wb_t, scale = prepare_binary_weight(weight, bin_mode)   # (K, N), (1, 1)
    else:
        wb_t, scale = prepared

    # ---- optional bf16 activation path (single-pass bf16 MXU) ----
    if mxu_bf16 and x.dtype != jnp.bfloat16:
        x = x.astype(jnp.bfloat16)

    # ---- tile sizes ----
    # Cut W HBM re-reads for large batches: W traffic = ceil(B/tm) * N*K*bytes.
    if B >= 4 * tm:
        tm = min(2 * tm, 1024)
    tm, Bp = _pick_tile(B, tm)
    tn, Np = _pick_tile(N, tn)
    tk, Kp = _pick_tile(K, tk)
    # v7x megacore: ensure >=2 blocks on a parallel axis when both would be 1.
    if Bp // tm == 1 and Np // tn == 1 and tn % 256 == 0:
        tn //= 2

    # ---- padding (only when actually needed; zeros are semantics-preserving) ----
    xp = x
    if (Bp, Kp) != (B, K):
        xp = jnp.pad(x, ((0, Bp - B), (0, Kp - K)))
    wp = wb_t
    if (Kp, Np) != (K, N):
        wp = jnp.pad(wb_t, ((0, Kp - K), (0, Np - N)))

    use_acc = out_dtype != jnp.float32       # f32 output accumulates in-place

    in_specs = [
        pl.BlockSpec(memory_space=pltpu.MemorySpace.SMEM),       # scale (1,1)
        pl.BlockSpec((tm, tk), lambda i, j, k: (i, k)),          # x tile
        pl.BlockSpec((tk, tn), lambda i, j, k: (k, j)),          # Wb^T tile
    ]
    args = [scale, xp, wp]
    if has_bias:
        bp = bias.astype(jnp.float32)
        if Np != N:
            bp = jnp.pad(bp, (0, Np - N))
        args.append(bp.reshape(1, Np))
        in_specs.append(pl.BlockSpec((1, tn), lambda i, j, k: (0, j)))

    kernel = functools.partial(
        _binary_linear_kernel, has_bias=has_bias, use_acc=use_acc)

    out = pl.pallas_call(
        kernel,
        out_shape=jax.ShapeDtypeStruct((Bp, Np), out_dtype),
        grid_spec=pltpu.PrefetchScalarGridSpec(
            num_scalar_prefetch=0,
            grid=(Bp // tm, Np // tn, Kp // tk),
            in_specs=in_specs,
            out_specs=pl.BlockSpec((tm, tn), lambda i, j, k: (i, j)),
            scratch_shapes=(
                [pltpu.VMEM((tm, tn), jnp.float32)] if use_acc else []),
        ),
        compiler_params=pltpu.CompilerParams(
            dimension_semantics=("parallel", "parallel", "arbitrary")),
    )(*args)

    if (Bp, Np) != (B, N):
        out = out[:B, :N]
    return out


def _reference(x, weight, bias, bin_mode):
    """Pure-JAX reference of the PyTorch forward for correctness checks."""
    scale = jnp.mean(jnp.abs(weight))
    if bin_mode == "binary":
        bw = (weight > 0.0).astype(jnp.float32) * scale * 0.3
    elif bin_mode == "relu":
        bw = jnp.clip(weight, 0.0, 1.0) * scale
    elif bin_mode == "sign":
        bw = jnp.sign(weight) * scale
    else:
        raise NotImplementedError
    out = x.astype(jnp.float32) @ bw.T
    if bias is not None:
        out = out + bias
    return out


if __name__ == "__main__":
    # Module __init__: weight ~ randn(out_features, in_features), bias = zeros(out).
    batch, in_features, out_features = 8, 32, 64

    key = jax.random.PRNGKey(0)
    kx, kw, kb = jax.random.split(key, 3)
    x = jax.random.normal(kx, (batch, in_features), dtype=jnp.float32)
    weight = jax.random.normal(kw, (out_features, in_features), dtype=jnp.float32)
    bias = jax.random.normal(kb, (out_features,), dtype=jnp.float32)

    # Exact-path cases (f32 MXU operands; bf16 weight storage is lossless for
    # binary/sign since values are {0,1}/{-1,0,+1}).
    for mode, b in [("binary", bias), ("relu", bias), ("sign", None)]:
        out = jax.block_until_ready(binary_linear(x, weight, b, bin_mode=mode))
        ref = _reference(x, weight, b, mode)
        assert out.shape == (batch, out_features)
        assert jnp.allclose(out, ref, atol=1e-5, rtol=1e-5), f"mismatch ({mode})"

    # bf16-activation MXU path (looser tolerance: x is rounded to bf16).
    out = jax.block_until_ready(
        binary_linear(x, weight, bias, bin_mode="binary", mxu_bf16=True))
    ref = _reference(x, weight, bias, "binary")
    assert out.shape == (batch, out_features)
    assert jnp.allclose(out, ref, atol=5e-2, rtol=5e-2), "mismatch (binary/bf16)"

    print("KERNEL_OK")
</pallas_src>

<mosaic_0001>
module attributes {stable_mosaic.version = 11 : i64} {
  func.func @_binary_linear_kernel(%arg0: i32, %arg1: i32, %arg2: i32, %arg3: memref<1x1xf32, #tpu.memory_space<smem>>, %arg4: memref<8x32xf32, #tpu.memory_space<vmem>>, %arg5: memref<32x64xbf16, #tpu.memory_space<vmem>>, %arg6: memref<1x64xf32, #tpu.memory_space<vmem>>, %arg7: memref<8x64xf32, #tpu.memory_space<vmem>>) attributes {dimension_semantics = [#tpu.dimension_semantics<parallel>, #tpu.dimension_semantics<parallel>, #tpu.dimension_semantics<arbitrary>], iteration_bounds = array<i64: 1, 1, 1>, scalar_prefetch = 0 : i64, scratch_operands = 0 : i64, tpu.core_type = #tpu.core_type<tc>, window_params = [{transform_indices = @transform_0, window_bounds = array<i64: 1, 1>}, {transform_indices = @transform_1, window_bounds = array<i64: 8, 32>}, {transform_indices = @transform_2, window_bounds = array<i64: 32, 64>}, {transform_indices = @transform_3, window_bounds = array<i64: 1, 64>}, {transform_indices = @transform_4, window_bounds = array<i64: 8, 64>}]} {
    %c0_i32 = arith.constant 0 : i32
    %0 = arith.cmpi eq, %arg2, %c0_i32 : i32
    %1 = arith.extui %0 : i1 to i32
    %c0_i32_0 = arith.constant 0 : i32
    %2 = arith.cmpi ne, %1, %c0_i32_0 : i32
    scf.if %2 {
      %cst_10 = arith.constant 0.000000e+00 : f32
      %13 = vector.broadcast %cst_10 : f32 to vector<8x64xf32>
      %c0_11 = arith.constant 0 : index
      %c0_12 = arith.constant 0 : index
      %14 = vector.load %arg7[%c0_11, %c0_12] : memref<8x64xf32, #tpu.memory_space<vmem>>, vector<8x64xf32>
      tpu.vector_store %arg7[%c0_11, %c0_12], %13 {strides = array<i32>} : memref<8x64xf32, #tpu.memory_space<vmem>>, vector<8x64xf32>,
    } else {
    }
    %c0 = arith.constant 0 : index
    %c0_1 = arith.constant 0 : index
    %3 = vector.load %arg4[%c0, %c0_1] : memref<8x32xf32, #tpu.memory_space<vmem>>, vector<8x32xf32>
    %c0_2 = arith.constant 0 : index
    %c0_3 = arith.constant 0 : index
    %4 = vector.load %arg5[%c0_2, %c0_3] : memref<32x64xbf16, #tpu.memory_space<vmem>>, vector<32x64xbf16>
    %5 = arith.extf %4 : vector<32x64xbf16> to vector<32x64xf32>
    %c0_4 = arith.constant 0 : index
    %c0_5 = arith.constant 0 : index
    %6 = vector.load %arg7[%c0_4, %c0_5] : memref<8x64xf32, #tpu.memory_space<vmem>>, vector<8x64xf32>
    %cst = arith.constant dense<0.000000e+00> : vector<8x64xf32>
    %7 = tpu.matmul %3, %5, %cst {dimension_numbers = #tpu.dot_dimension_numbers<[1], [0], [0], [1], [0, 0, 1, 1], [], []>} : vector<8x32xf32>, vector<32x64xf32>, vector<8x64xf32> -> vector<8x64xf32>
    %8 = arith.addf %6, %7 : vector<8x64xf32>
    %c0_6 = arith.constant 0 : index
    %c0_7 = arith.constant 0 : index
    %9 = vector.load %arg7[%c0_6, %c0_7] : memref<8x64xf32, #tpu.memory_space<vmem>>, vector<8x64xf32>
    tpu.vector_store %arg7[%c0_6, %c0_7], %8 {strides = array<i32>} : memref<8x64xf32, #tpu.memory_space<vmem>>, vector<8x64xf32>,
    %c0_i32_8 = arith.constant 0 : i32
    %10 = arith.cmpi eq, %arg2, %c0_i32_8 : i32
    %11 = arith.extui %10 : i1 to i32
    %c0_i32_9 = arith.constant 0 : i32
    %12 = arith.cmpi ne, %11, %c0_i32_9 : i32
    scf.if %12 {
      %c0_10 = arith.constant 0 : index
      %c0_11 = arith.constant 0 : index
      %13 = vector.load %arg7[%c0_10, %c0_11] : memref<8x64xf32, #tpu.memory_space<vmem>>, vector<8x64xf32>
      %c0_12 = arith.constant 0 : index
      %c0_13 = arith.constant 0 : index
      %14 = memref.load %arg3[%c0_12, %c0_13] : memref<1x1xf32, #tpu.memory_space<smem>>
      %15 = vector.broadcast %14 : f32 to vector<8x64xf32>
      %16 = arith.mulf %13, %15 : vector<8x64xf32>
      %c0_14 = arith.constant 0 : index
      %c0_15 = arith.constant 0 : index
      %17 = vector.load %arg6[%c0_14, %c0_15] : memref<1x64xf32, #tpu.memory_space<vmem>>, vector<1x64xf32>
      %18 = vector.broadcast %17 : vector<1x64xf32> to vector<8x64xf32>
      %19 = arith.addf %16, %18 : vector<8x64xf32>
      %c0_16 = arith.constant 0 : index
      %c0_17 = arith.constant 0 : index
      %20 = vector.load %arg7[%c0_16, %c0_17] : memref<8x64xf32, #tpu.memory_space<vmem>>, vector<8x64xf32>
      tpu.vector_store %arg7[%c0_16, %c0_17], %19 {strides = array<i32>} : memref<8x64xf32, #tpu.memory_space<vmem>>, vector<8x64xf32>,
    } else {
    }
    return
  }
  func.func @transform_0(%arg0: i32, %arg1: i32, %arg2: i32) -> (i32, i32) {
    %c0_i32 = arith.constant 0 : i32
    %c0_i32_0 = arith.constant 0 : i32
    %c0_i32_1 = arith.constant 0 : i32
    return %c0_i32, %c0_i32_0 : i32, i32
  }
  func.func @transform_1(%arg0: i32, %arg1: i32, %arg2: i32) -> (i32, i32) {
    %c0_i32 = arith.constant 0 : i32
    return %arg0, %arg2 : i32, i32
  }
  func.func @transform_2(%arg0: i32, %arg1: i32, %arg2: i32) -> (i32, i32) {
    %c0_i32 = arith.constant 0 : i32
    return %arg2, %arg1 : i32, i32
  }
  func.func @transform_3(%arg0: i32, %arg1: i32, %arg2: i32) -> (i32, i32) {
    %c0_i32 = arith.constant 0 : i32
    %c0_i32_0 = arith.constant 0 : i32
    return %c0_i32, %arg1 : i32, i32
  }
  func.func @transform_4(%arg0: i32, %arg1: i32, %arg2: i32) -> (i32, i32) {
    %c0_i32 = arith.constant 0 : i32
    return %arg0, %arg1 : i32, i32
  }
}

</mosaic_0001>

<llo_original>
// kernel: tpu_custom_call.1
$region0: #{tpu_custom_call.1}
  #allocation0 [shape = 'u32[]', space=smem, size = 0x4, offset = 0x4, fixed_abs, tag = 'smem constant byte address 0x4 - core index']
  #allocation1 [shape = 'u32[144,128]{1,0:T(1,128)}', space=vmem, size = 0x12000, scoped, tag = 'internal scratch']
  #allocation2 [shape = 'f32[1,1]{1,0:T(1,128)S(6)}', space=smem, size = 0x200, scoped, tag = 'scoped memory for tpu_custom_call.1']
  %s0 = inlined_call_operand.<no memory space> [shape: f32[1,1], index: 0, kind: input, shape index: {}]
  %s1 = inlined_call_operand.hbm [shape: f32[8,32], index: 1, kind: input, shape index: {}]
  %s2 = inlined_call_operand.hbm [shape: bf16[32,64], index: 2, kind: input, shape index: {}]
  %s3 = inlined_call_operand.vmem [shape: f32[1,64], index: 3, kind: input, shape index: {}]
  %s4 = inlined_call_operand.hbm [shape: f32[8,64], index: 4, kind: output, shape index: {}]
  %s5 = sld [smem:[#allocation0]]
  $region42: #{tpu_custom_call.1} parent=0
    _
  %s7 = ssub.s32 1, %s5
  %s8 = scalar_select 0, %s7, %s5
  %9 = sst [smem:[#allocation2]] %s0
  $region1: #{tpu_custom_call.1} parent=0
    #allocation3 [shape = 'u8[4096]{0}', space=vmem, size = 0x1000, scoped, tag = 'input window, operand 1, single buffered']
    #allocation4 [shape = 's32[1]{0}', space=sflag, size = 0x4, scoped, tag = 'scoped memory for tpu_custom_call.1']
    #allocation5 [shape = 's32[1]{0}', space=sflag, size = 0x4, scoped, tag = 'scoped memory for tpu_custom_call.1']
    #allocation6 [shape = 'u8[8192]{0}', space=vmem, size = 0x2000, scoped, tag = 'input window, operand 2, single buffered']
    #allocation7 [shape = 's32[1]{0}', space=sflag, size = 0x4, scoped, tag = 'scoped memory for tpu_custom_call.1']
    #allocation8 [shape = 'u8[4096]{0}', space=vmem, size = 0x1000, scoped, tag = 'output window, operand 0, single buffered']
    %10 = vsyncpa [#allocation4], 0
    %11 = vsyncpa [#allocation7], 0
    %12 = vsyncpa [#allocation5], 0
    // Predicated region
    $region2: #{tpu_custom_call.1} parent=1 // pred_check
      _
    $region3: #{tpu_custom_call.1} parent=1 // pred_check_branch
      %14 = sbr.rel (0) target = $region5
    $region4: #{tpu_custom_call.1} parent=1 // pred_region
      _
    $region5: #{tpu_custom_call.1} parent=1 // pred_fallthru
      _
    // Predicated region
    $region6: #{tpu_custom_call.1} parent=1 // pred_check
      _
    $region7: #{tpu_custom_call.1} parent=1 // pred_check_branch
      %16 = sbr.rel (0) target = $region9
    $region8: #{tpu_custom_call.1} parent=1 // pred_region
      %s18 = ssub.s32 128, 128
      %19 = vsyncadd [#allocation4], %s18
      %s21 = sshll.u32 [#allocation3], 4
      %s22 = int_to_ptr.vmem [resolvable:$true] %s21
      %24 = dma.hbm_to_vmem [thread:$0]  %s1, 128, %s22, [#allocation4]
    $region9: #{tpu_custom_call.1} parent=1 // pred_fallthru
      _
    // Predicated region
    $region10: #{tpu_custom_call.1} parent=1 // pred_check
      _
    $region11: #{tpu_custom_call.1} parent=1 // pred_check_branch
      %26 = sbr.rel (0) target = $region13
    $region12: #{tpu_custom_call.1} parent=1 // pred_region
      %s28 = ssub.s32 256, 256
      %29 = vsyncadd [#allocation7], %s28
      %s30 = sshll.u32 [#allocation6], 4
      %s31 = int_to_ptr.vmem [resolvable:$true] %s30
      %36 = dma.hbm_to_vmem [thread:$0]  %s2, 256, %s31, [#allocation7], 64, 64, 4
    $region13: #{tpu_custom_call.1} parent=1 // pred_fallthru
      _
    // Predicated region
    $region14: #{tpu_custom_call.1} parent=1 // pred_check
      _
    $region15: #{tpu_custom_call.1} parent=1 // pred_check_branch
      %38 = sbr.rel (0) target = $region17
    $region16: #{tpu_custom_call.1} parent=1 // pred_region
      _
    $region17: #{tpu_custom_call.1} parent=1 // pred_fallthru
      _
    // Predicated region
    $region18: #{tpu_custom_call.1} parent=1 // pred_check
      _
    $region19: #{tpu_custom_call.1} parent=1 // pred_check_branch
      %40 = sbr.rel (0) target = $region21
    $region20: #{tpu_custom_call.1} parent=1 // pred_region
      %41 = dma.done [#allocation4], 128
    $region21: #{tpu_custom_call.1} parent=1 // pred_fallthru
      _
    // Predicated region
    $region22: #{tpu_custom_call.1} parent=1 // pred_check
      _
    $region23: #{tpu_custom_call.1} parent=1 // pred_check_branch
      %43 = sbr.rel (0) target = $region25
    $region24: #{tpu_custom_call.1} parent=1 // pred_region
      %44 = dma.done [#allocation7], 256
    $region25: #{tpu_custom_call.1} parent=1 // pred_fallthru
      _
    %p45 = scmp.eq.s32.totalorder 0, 0
    // Predicated region
    $region26: #{tpu_custom_call.1} parent=1 // pred_check
      %p46 = pneg %p45
    $region27: #{tpu_custom_call.1} parent=1 // pred_check_branch
      %48 = sbr.rel (%p46) target = $region29
    $region28: #{tpu_custom_call.1} parent=1 // pred_region
      %vm49 = vcmask 523264
      %50 = vst.msk [vmem:[#allocation8] sm:$0xff] %vm49, 0.0
    $region29: #{tpu_custom_call.1} parent=1 // pred_fallthru
      _
    %v51 = vld [vmem:[#allocation3] sm:$0xff]
    %v52 = vld [vmem:[#allocation6] sm:$0xf]
    %v53 = vld [vmem:[#allocation6 + $0x4] sm:$0xf]
    %v54 = vld [vmem:[#allocation6 + $0x8] sm:$0xf]
    %v55 = vld [vmem:[#allocation6 + $0xc] sm:$0xf]
    %v56 = vunpack.c.l.bf16 %v52
    %v57 = vunpack.c.l.bf16 %v53
    %v58 = vunpack.c.l.bf16 %v54
    %v59 = vunpack.c.l.bf16 %v55
    %v60 = vld [vmem:[#allocation8] sm:$0xff]
    %vm61 = vcmask 261120
    %v63 = vsel %vm61, %v51, 0
    %65 = vmatprep.subr.mxu0 0.0
    %66 = vmatpush1.msra.mxu0 0.0
    %67 = vmatprep.subr.mxu0 0.0
    %68 = vmatpush1.msra.mxu0 0.0
    %69 = vmatprep.subr.mxu0 0.0
    %70 = vmatpush1.msra.mxu0 0.0
    %71 = vmatprep.subr.mxu0 0.0
    %72 = vmatpush1.msra.mxu0 0.0
    %73 = vmatprep.subr.mxu0 0.0
    %74 = vmatpush1.msra.mxu0 0.0
    %75 = vmatprep.subr.mxu0 0.0
    %76 = vmatpush1.msra.mxu0 0.0
    %77 = vmatprep.subr.mxu0 0.0
    %78 = vmatpush1.msra.mxu0 0.0
    %79 = vmatprep.subr.mxu0 0.0
    %80 = vmatpush1.msra.mxu0 0.0
    %81 = vmatprep.subr.mxu0 0.0
    %82 = vmatpush1.msra.mxu0 0.0
    %83 = vmatprep.subr.mxu0 0.0
    %84 = vmatpush1.msra.mxu0 0.0
    %85 = vmatprep.subr.mxu0 0.0
    %86 = vmatpush1.msra.mxu0 0.0
    %87 = vmatprep.subr.mxu0 0.0
    %88 = vmatpush1.msra.mxu0 0.0
    %89 = vmatprep.subr.mxu0 0.0
    %90 = vmatpush1.msra.mxu0 %v59
    %91 = vmatprep.subr.mxu0 0.0
    %92 = vmatpush1.msra.mxu0 %v58
    %93 = vmatprep.subr.mxu0 0.0
    %94 = vmatpush1.msra.mxu0 %v57
    %95 = vmatprep.subr.mxu0 0.0
    %96 = vmatpush1.msra.mxu0 %v56
    %97 = vmatprep.subr.mxu0 0.0
    %98 = vmatpush2.msra.mxu0 0.0
    %99 = vmatprep.subr.mxu0 0.0
    %100 = vmatpush2.msra.mxu0 0.0
    %101 = vmatprep.subr.mxu0 0.0
    %102 = vmatpush2.msra.mxu0 0.0
    %103 = vmatprep.subr.mxu0 0.0
    %104 = vmatpush2.msra.mxu0 0.0
    %105 = vmatprep.subr.mxu0 0.0
    %106 = vmatpush2.msra.mxu0 0.0
    %107 = vmatprep.subr.mxu0 0.0
    %108 = vmatpush2.msra.mxu0 0.0
    %109 = vmatprep.subr.mxu0 0.0
    %110 = vmatpush2.msra.mxu0 0.0
    %111 = vmatprep.subr.mxu0 0.0
    %112 = vmatpush2.msra.mxu0 0.0
    %113 = vmatprep.subr.mxu0 0.0
    %114 = vmatpush2.msra.mxu0 0.0
    %115 = vmatprep.subr.mxu0 0.0
    %116 = vmatpush2.msra.mxu0 0.0
    %117 = vmatprep.subr.mxu0 0.0
    %118 = vmatpush2.msra.mxu0 0.0
    %119 = vmatprep.subr.mxu0 0.0
    %120 = vmatpush2.msra.mxu0 0.0
    %121 = vmatprep.subr.mxu0 0.0
    %122 = vmatpush2.msra.mxu0 0.0
    %123 = vmatprep.subr.mxu0 0.0
    %124 = vmatpush2.msra.mxu0 0.0
    %125 = vmatprep.subr.mxu0 0.0
    %126 = vmatpush2.msra.mxu0 0.0
    %127 = vmatprep.subr.mxu0 0.0
    %128 = vmatpush2.msra.mxu0 0.0
    %129 = vmatprep.mubr.f32.mxu0 0.0
    %130 = vmatmul.mubr.f32.gmra.mxu0 %v63
    %v131 = vpop.f32.mrf.mxu0
    %v132 = vadd.f32 0.0, %v131
    %v133 = vpop.f32.mrf.mxu0
    %134 = vdwg.mxu0
    %v135 = vadd.f32 %v60, %v132
    %vm136 = vcmask 523264
    %137 = vst.msk [vmem:[#allocation8] sm:$0xff] %vm136, %v135
    // Predicated region
    $region30: #{tpu_custom_call.1} parent=1 // pred_check
      %p138 = pneg %p45
    $region31: #{tpu_custom_call.1} parent=1 // pred_check_branch
      %140 = sbr.rel (%p138) target = $region33
    $region32: #{tpu_custom_call.1} parent=1 // pred_region
      %v141 = vld [vmem:[#allocation8] sm:$0xff]
      %s142 = sld [smem:[#allocation2]]
      %v143 = vstv %s142
      %v144 = vmul.f32 %v141, %v143
      %v145 = vld [vmem:[%s3] sm:$0x1]
      %v147 = vlaneseq
      %v148 = vshrl.u32 %v147, 7
      %v149 = vsub.s32 0, %v148
      %v150 = vrot.slane %v145, %v149
      %v152 = vadd.f32 %v144, %v150
      %153 = vst.msk [vmem:[#allocation8] sm:$0xff] %vm136, %v152
    $region33: #{tpu_custom_call.1} parent=1 // pred_fallthru
      _
    // Predicated region
    $region34: #{tpu_custom_call.1} parent=1 // pred_check
      _
    $region35: #{tpu_custom_call.1} parent=1 // pred_check_branch
      %155 = sbr.rel (0) target = $region37
    $region36: #{tpu_custom_call.1} parent=1 // pred_region
      %s157 = ssub.s32 128, 128
      %158 = vsyncadd [#allocation5], %s157
      %s160 = sshll.u32 [#allocation8], 4
      %s161 = int_to_ptr.vmem [resolvable:$true] %s160
      %163 = dma.vmem_to_hbm [thread:$0]  %s161, 128, %s4, [#allocation5]
    $region37: #{tpu_custom_call.1} parent=1 // pred_fallthru
      _
    // Predicated region
    $region38: #{tpu_custom_call.1} parent=1 // pred_check
      _
    $region39: #{tpu_custom_call.1} parent=1 // pred_check_branch
      %165 = sbr.rel (0) target = $region41
    $region40: #{tpu_custom_call.1} parent=1 // pred_region
      %166 = dma.done [#allocation5], 128
    $region41: #{tpu_custom_call.1} parent=1 // pred_fallthru
      _
    %167 = vsyncpa [#allocation4], 1
    %168 = vsyncpa [#allocation7], 1
    %169 = vsyncpa [#allocation5], 1

</llo_original>
